<compile_context>
chip_gen: v6e
topology: v6e:2x2x1
jax: 0.10.0
libtpu: 0.0.40
codegen_flags: <defaults>
</compile_context>

<pallas_src>
import numpy as np

import jax
import jax.numpy as jnp
from jax.experimental import pallas as pl
from jax.experimental.pallas import tpu as pltpu


def _round_up(x, m):
    return (x + m - 1) // m * m


# ----------------------------- kernel ----------------------------------------

def _make_kernel(srnn_type, s_pad, t_chunk, mx_dtype):
    """Fused, time-chunked kernel for one srnn_type (all trace-time constants)."""

    def kernel(*refs):
        if srnn_type == 1:
            h0_ref, x_ref, u_ref, hs_ref, h_sc = refs
        elif srnn_type == 2:
            h0_ref, x_ref, gx_ref, wh_ref, hs_ref, h_sc = refs
        else:  # srnn_type == 3
            h0_ref, x_ref, gx_ref, wh_ref, u_ref, hs_ref, h_sc = refs

        @pl.when(pl.program_id(1) == 0)
        def _():
            h_sc[...] = h0_ref[...].astype(jnp.float32)

        # Carried hidden state stays in vregs for the whole chunk; the VMEM
        # scratch is read/written once per chunk.
        h = h_sc[...]

        # Time-chunk loop: t_chunk is a small static int, so this trace-time
        # loop is the fully-unrolled equivalent of lax.fori_loop(unroll=True).
        for t in range(t_chunk):
            x = x_ref[t].astype(jnp.float32)
            if srnn_type == 1:
                h_new = jnp.maximum(
                    jnp.dot(h.astype(mx_dtype), u_ref[...],
                            preferred_element_type=jnp.float32) + x, 0.0)
            else:
                # One MXU dot on the sequential path:
                #   type 2: h @ [Uz | U ]      type 3: h @ [Uz | Ur]
                hz = jnp.dot(h.astype(mx_dtype), wh_ref[...],
                             preferred_element_type=jnp.float32)
                gx = gx_ref[t].astype(jnp.float32)   # precomputed x projections
                if srnn_type == 2:
                    z_t = jax.nn.sigmoid(hz[:, :s_pad] + gx)
                    h_tp = jnp.maximum(hz[:, s_pad:] + x, 0.0)
                else:
                    z_t = jax.nn.sigmoid(hz[:, :s_pad] + gx[:, :s_pad])
                    z_r = jax.nn.sigmoid(hz[:, s_pad:] + gx[:, s_pad:])
                    h_tp = jnp.maximum(
                        jnp.dot((h * z_r).astype(mx_dtype), u_ref[...],
                                preferred_element_type=jnp.float32) + x, 0.0)
                # Blend as h + z*(h_tp - h): keeps zero padding exactly zero.
                h_new = h + z_t * (h_tp - h)

            hs_ref[t] = h_new.astype(hs_ref.dtype)   # lane-dense streamed store
            h = h_new

        h_sc[...] = h

    return kernel


# ----------------- weight packing & x-projection prologue ---------------------

def _pad2(w, S, s_pad):
    return jnp.zeros((s_pad, s_pad), jnp.float32).at[:S, :S].set(
        w.astype(jnp.float32))


def _prepare(params, xs, srnn_type, S, s_pad, t_pad, b_pad, mx_dtype):
    """Pack the in-kernel weights (zero-padded, h-side stacked) and precompute
    the input projections x@Wz / x@Wr for the whole sequence as one big XLA
    matmul (full precision, off the sequential critical path)."""
    T, B, _ = xs.shape
    U = _pad2(params["U"], S, s_pad)
    if srnn_type == 1:
        return (U.astype(mx_dtype),), ()

    xs32 = xs.astype(jnp.float32)
    Uz = _pad2(params["Uz"], S, s_pad)
    xz = xs32 @ params["Wz"].astype(jnp.float32)                 # (T, B, S)
    if srnn_type == 2:
        wh = jnp.concatenate([Uz, U], axis=1).astype(mx_dtype)   # (S, 2S) = [Uz|U]
        gx = jnp.zeros((t_pad, b_pad, s_pad), jnp.float32).at[:T, :B, :S].set(xz)
        return (wh,), (gx,)

    Ur = _pad2(params["Ur"], S, s_pad)
    xr = xs32 @ params["Wr"].astype(jnp.float32)                 # (T, B, S)
    wh = jnp.concatenate([Uz, Ur], axis=1).astype(mx_dtype)      # (S, 2S) = [Uz|Ur]
    gx = (jnp.zeros((t_pad, b_pad, 2 * s_pad), jnp.float32)
          .at[:T, :B, :S].set(xz)
          .at[:T, :B, s_pad:s_pad + S].set(xr))
    return (wh, U.astype(mx_dtype)), (gx,)


# ------------------------------ wrappers --------------------------------------

def srnn_sequence_forward(ht_1, xs, params, srnn_type, *,
                          matmul_dtype=jnp.bfloat16,
                          t_chunk=None,
                          b_tile_cap=256):
    """Apply SRnnCell.forward over a sequence in ONE pallas_call.

    ht_1: [B, S]  initial hidden state.
    xs:   [T, B, S]  inputs (input_ln is None, so input_dim == state_dim).
    Returns hs: [T, B, S], the hidden state after every step.
    With T == 1 this is exactly the PyTorch module's forward.
    """
    T, B, S = xs.shape
    assert ht_1.shape == (B, S)
    assert srnn_type in (1, 2, 3)

    s_pad = _round_up(max(S, 128), 128)          # lane-dense feature dim
    # b_tile up to 256 fills the 256-wide MXU M dim on v6e/v7x; pass
    # b_tile_cap=128 on v5e.  On v7x, for 128 < B <= 256, prefer a tile of
    # b_pad//2 so nb >= 2 and the "parallel" axis actually feeds both cores.
    b_tile = min(_round_up(B, 8), b_tile_cap)
    b_pad = _round_up(B, b_tile)
    nb = b_pad // b_tile

    if t_chunk is None:
        t_chunk = 8                              # amortize pipeline boundaries
    t_chunk = max(1, min(t_chunk, T))
    t_pad = _round_up(T, t_chunk)
    nt = t_pad // t_chunk

    out_dtype = ht_1.dtype
    h0 = jnp.zeros((b_pad, s_pad), jnp.float32).at[:B, :S].set(
        ht_1.astype(jnp.float32))
    # NOTE(v5e): casting xp / gx streams (and hs output) to bfloat16 halves the
    # only per-step HBM traffic; kept f32 here for accuracy.
    xp = jnp.zeros((t_pad, b_pad, s_pad), xs.dtype).at[:T, :B, :S].set(xs)
    w_mats, gx_streams = _prepare(params, xs, srnn_type, S, s_pad, t_pad,
                                  b_pad, matmul_dtype)

    kernel = _make_kernel(srnn_type, s_pad, t_chunk, matmul_dtype)

    stream_specs = [
        pl.BlockSpec((b_tile, s_pad), lambda b, c: (b, 0)),              # h0
        pl.BlockSpec((t_chunk, b_tile, s_pad), lambda b, c: (c, b, 0)),  # x slab
    ]
    for g in gx_streams:                                                 # x-proj slab
        stream_specs.append(
            pl.BlockSpec((t_chunk, b_tile, g.shape[-1]), lambda b, c: (c, b, 0)))
    # Weights: constant block index -> DMA'd once, VMEM-resident for the grid.
    weight_specs = [pl.BlockSpec(w.shape, lambda b, c: (0, 0)) for w in w_mats]
    out_spec = pl.BlockSpec((t_chunk, b_tile, s_pad), lambda b, c: (c, b, 0))

    # VMEM budget: double-buffered streams + weights + the carried-h scratch.
    # Clamp to <= 48 MiB so the request fits v7x's 64 MiB physical VMEM.
    def _nbytes(shape, dt):
        n = 1
        for d in shape:
            n *= int(d)
        return n * np.dtype(dt).itemsize

    stream_bytes = (_nbytes((b_tile, s_pad), jnp.float32)
                    + _nbytes((t_chunk, b_tile, s_pad), xs.dtype)
                    + sum(_nbytes((t_chunk, b_tile, g.shape[-1]), g.dtype)
                          for g in gx_streams)
                    + _nbytes((t_chunk, b_tile, s_pad), out_dtype))
    weight_bytes = sum(_nbytes(w.shape, w.dtype) for w in w_mats)
    need = 2 * (stream_bytes + weight_bytes) + _nbytes((b_tile, s_pad), jnp.float32)
    vmem_limit = int(min(max(need + (8 << 20), 32 << 20), 48 << 20))

    grid_spec = pltpu.PrefetchScalarGridSpec(
        num_scalar_prefetch=0,
        grid=(nb, nt),
        in_specs=stream_specs + weight_specs,
        out_specs=out_spec,
        scratch_shapes=[pltpu.VMEM((b_tile, s_pad), jnp.float32)],  # carried h
    )

    hs = pl.pallas_call(
        kernel,
        out_shape=jax.ShapeDtypeStruct((t_pad, b_pad, s_pad), out_dtype),
        grid_spec=grid_spec,
        compiler_params=pltpu.CompilerParams(
            dimension_semantics=("parallel", "arbitrary"),  # batch || , time seq
            vmem_limit_bytes=vmem_limit,
        ),
    )(h0, xp, *gx_streams, *w_mats)

    return hs[:T, :B, :S]


def srnn_cell_forward(ht_1, x, params, srnn_type, *, matmul_dtype=jnp.bfloat16):
    """Single-step forward: identical semantics to SRnnCell.forward (input_ln=None)."""
    return srnn_sequence_forward(ht_1, x[None], params, srnn_type,
                                 matmul_dtype=matmul_dtype)[0]


# --------------------------- pure-JAX reference -------------------------------

def srnn_cell_ref(ht_1, x, params, srnn_type):
    if srnn_type == 1:
        return jax.nn.relu(x + ht_1 @ params["U"])
    if srnn_type == 2:
        h_tp = jax.nn.relu(ht_1 @ params["U"] + x)
        z_t = jax.nn.sigmoid(ht_1 @ params["Uz"] + x @ params["Wz"])
        return ht_1 * (1.0 - z_t) + h_tp * z_t
    if srnn_type == 3:
        z_r = jax.nn.sigmoid(ht_1 @ params["Ur"] + x @ params["Wr"])
        h_tp = jax.nn.relu((ht_1 * z_r) @ params["U"] + x)
        z_t = jax.nn.sigmoid(ht_1 @ params["Uz"] + x @ params["Wz"])
        return ht_1 * (1.0 - z_t) + h_tp * z_t
    raise AssertionError


def srnn_sequence_ref(ht_1, xs, params, srnn_type):
    def step(h, x):
        h_new = srnn_cell_ref(h, x, params, srnn_type)
        return h_new, h_new
    _, hs = jax.lax.scan(step, ht_1, xs)
    return hs


# --------------------------------- main ---------------------------------------

if __name__ == "__main__":
    B, S, T = 8, 32, 8   # batch, state_dim == input_dim (input_ln is None), seq len

    key = jax.random.PRNGKey(0)
    kh, kx, ku, kwz, kuz, kwr, kur = jax.random.split(key, 7)

    ht_1 = jax.random.normal(kh, (B, S), jnp.float32)
    xs = jax.random.normal(kx, (T, B, S), jnp.float32)

    # Weights stored as (in, out) = PyTorch nn.Linear weight transposed.
    scale = 0.08
    params = {
        "U":  scale * jax.random.normal(ku,  (S, S), jnp.float32),
        "Wz": scale * jax.random.normal(kwz, (S, S), jnp.float32),
        "Uz": scale * jax.random.normal(kuz, (S, S), jnp.float32),
        "Wr": scale * jax.random.normal(kwr, (S, S), jnp.float32),
        "Ur": scale * jax.random.normal(kur, (S, S), jnp.float32),
    }

    ok = True
    for srnn_type in (1, 2, 3):
        # 1) single step == SRnnCell.forward (f32 recurrent matmuls).
        out1 = jax.block_until_ready(
            srnn_cell_forward(ht_1, xs[0], params, srnn_type,
                              matmul_dtype=jnp.float32))
        ref1 = srnn_cell_ref(ht_1, xs[0], params, srnn_type)
        if not jnp.allclose(out1, ref1, atol=1e-2, rtol=1e-2):
            ok = False
            print(f"single-step MISMATCH srnn_type={srnn_type}: "
                  f"max err {float(jnp.max(jnp.abs(out1 - ref1))):.3e}")

        ref2 = srnn_sequence_ref(ht_1, xs, params, srnn_type)

        # 2) fused time-chunked sequence, f32 recurrent matmuls (drift check).
        out2 = jax.block_until_ready(
            srnn_sequence_forward(ht_1, xs, params, srnn_type,
                                  matmul_dtype=jnp.float32))
        if not jnp.allclose(out2, ref2, atol=1e-2, rtol=1e-2):
            ok = False
            print(f"sequence(f32) MISMATCH srnn_type={srnn_type}: "
                  f"max err {float(jnp.max(jnp.abs(out2 - ref2))):.3e}")

        # 3) perf path: bf16 recurrent matmuls (f32 accumulation + gate math,
        #    f32 precomputed x projections).
        out3 = jax.block_until_ready(
            srnn_sequence_forward(ht_1, xs, params, srnn_type))
        if not jnp.allclose(out3, ref2, atol=5e-2, rtol=5e-2):
            ok = False
            print(f"sequence(bf16) MISMATCH srnn_type={srnn_type}: "
                  f"max err {float(jnp.max(jnp.abs(out3 - ref2))):.3e}")

    if ok:
        print("KERNEL_OK")
</pallas_src>

<mosaic_0001>
module attributes {stable_mosaic.version = 11 : i64} {
  func.func @kernel(%arg0: i32, %arg1: i32, %arg2: memref<8x128xf32, #tpu.memory_space<vmem>>, %arg3: memref<1x8x128xf32, #tpu.memory_space<vmem>>, %arg4: memref<128x128xf32, #tpu.memory_space<vmem>>, %arg5: memref<1x8x128xf32, #tpu.memory_space<vmem>>, %arg6: memref<8x128xf32, #tpu.memory_space<vmem>>) attributes {dimension_semantics = [#tpu.dimension_semantics<parallel>, #tpu.dimension_semantics<arbitrary>], iteration_bounds = array<i64: 1, 1>, scalar_prefetch = 0 : i64, scratch_operands = 1 : i64, tpu.core_type = #tpu.core_type<tc>, window_params = [{transform_indices = @transform_0, window_bounds = array<i64: 8, 128>}, {transform_indices = @transform_1, window_bounds = array<i64: 1, 8, 128>}, {pipeline_mode = #tpu.pipeline_mode<synchronous>, transform_indices = @transform_2, window_bounds = array<i64: 128, 128>}, {transform_indices = @transform_3, window_bounds = array<i64: 1, 8, 128>}]} {
    %c0_i32 = arith.constant 0 : i32
    %0 = arith.cmpi eq, %arg1, %c0_i32 : i32
    %1 = arith.extui %0 : i1 to i32
    %c0_i32_0 = arith.constant 0 : i32
    %2 = arith.cmpi ne, %1, %c0_i32_0 : i32
    scf.if %2 {
      %c0_13 = arith.constant 0 : index
      %c0_14 = arith.constant 0 : index
      %15 = vector.load %arg2[%c0_13, %c0_14] : memref<8x128xf32, #tpu.memory_space<vmem>>, vector<8x128xf32>
      %c0_15 = arith.constant 0 : index
      %c0_16 = arith.constant 0 : index
      %16 = vector.load %arg6[%c0_15, %c0_16] : memref<8x128xf32, #tpu.memory_space<vmem>>, vector<8x128xf32>
      tpu.vector_store %arg6[%c0_15, %c0_16], %15 {strides = array<i32>} : memref<8x128xf32, #tpu.memory_space<vmem>>, vector<8x128xf32>,
    } else {
    }
    %c0 = arith.constant 0 : index
    %c0_1 = arith.constant 0 : index
    %3 = vector.load %arg6[%c0, %c0_1] : memref<8x128xf32, #tpu.memory_space<vmem>>, vector<8x128xf32>
    %c0_2 = arith.constant 0 : index
    %c0_3 = arith.constant 0 : index
    %c0_4 = arith.constant 0 : index
    %4 = vector.load %arg3[%c0_2, %c0_3, %c0_4] : memref<1x8x128xf32, #tpu.memory_space<vmem>>, vector<1x8x128xf32>
    %5 = vector.shape_cast %4 : vector<1x8x128xf32> to vector<8x128xf32>
    %c0_5 = arith.constant 0 : index
    %c0_6 = arith.constant 0 : index
    %6 = vector.load %arg4[%c0_5, %c0_6] : memref<128x128xf32, #tpu.memory_space<vmem>>, vector<128x128xf32>
    %cst = arith.constant dense<0.000000e+00> : vector<8x128xf32>
    %7 = tpu.matmul %3, %6, %cst {dimension_numbers = #tpu.dot_dimension_numbers<[1], [0], [0], [1], [0, 0, 1, 1], [], []>} : vector<8x128xf32>, vector<128x128xf32>, vector<8x128xf32> -> vector<8x128xf32>
    %8 = arith.addf %7, %5 : vector<8x128xf32>
    %cst_7 = arith.constant 0.000000e+00 : f32
    %9 = vector.broadcast %cst_7 : f32 to vector<8x128xf32>
    %10 = arith.maximumf %8, %9 : vector<8x128xf32>
    %c0_8 = arith.constant 0 : index
    %c0_9 = arith.constant 0 : index
    %c0_10 = arith.constant 0 : index
    %11 = vector.load %arg5[%c0_8, %c0_9, %c0_10] : memref<1x8x128xf32, #tpu.memory_space<vmem>>, vector<1x8x128xf32>
    %12 = vector.shape_cast %11 : vector<1x8x128xf32> to vector<8x128xf32>
    %13 = vector.shape_cast %10 : vector<8x128xf32> to vector<1x8x128xf32>
    tpu.vector_store %arg5[%c0_8, %c0_9, %c0_10], %13 {strides = array<i32>} : memref<1x8x128xf32, #tpu.memory_space<vmem>>, vector<1x8x128xf32>,
    %c0_11 = arith.constant 0 : index
    %c0_12 = arith.constant 0 : index
    %14 = vector.load %arg6[%c0_11, %c0_12] : memref<8x128xf32, #tpu.memory_space<vmem>>, vector<8x128xf32>
    tpu.vector_store %arg6[%c0_11, %c0_12], %10 {strides = array<i32>} : memref<8x128xf32, #tpu.memory_space<vmem>>, vector<8x128xf32>,
    return
  }
  func.func @transform_0(%arg0: i32, %arg1: i32) -> (i32, i32) {
    %c0_i32 = arith.constant 0 : i32
    %c0_i32_0 = arith.constant 0 : i32
    return %arg0, %c0_i32 : i32, i32
  }
  func.func @transform_1(%arg0: i32, %arg1: i32) -> (i32, i32, i32) {
    %c0_i32 = arith.constant 0 : i32
    %c0_i32_0 = arith.constant 0 : i32
    return %arg1, %arg0, %c0_i32 : i32, i32, i32
  }
  func.func @transform_2(%arg0: i32, %arg1: i32) -> (i32, i32) {
    %c0_i32 = arith.constant 0 : i32
    %c0_i32_0 = arith.constant 0 : i32
    %c0_i32_1 = arith.constant 0 : i32
    return %c0_i32, %c0_i32_0 : i32, i32
  }
  func.func @transform_3(%arg0: i32, %arg1: i32) -> (i32, i32, i32) {
    %c0_i32 = arith.constant 0 : i32
    %c0_i32_0 = arith.constant 0 : i32
    return %arg1, %arg0, %c0_i32 : i32, i32, i32
  }
}

</mosaic_0001>

<llo_original>
// kernel: tpu_custom_call.1
$region0: #{tpu_custom_call.1}
  #allocation0 [shape = 'u32[]', space=smem, size = 0x4, offset = 0x4, fixed_abs, tag = 'smem constant byte address 0x4 - core index']
  #allocation1 [shape = 'u32[144,128]{1,0:T(1,128)}', space=vmem, size = 0x12000, scoped, tag = 'internal scratch']
  #allocation2 [shape = 'f32[8,128]{1,0:T(8,128)}', space=vmem, size = 0x1000, scoped, tag = 'scratch operand']
  %s0 = inlined_call_operand.hbm [shape: f32[8,128], index: 0, kind: input, shape index: {}]
  %s1 = inlined_call_operand.hbm [shape: f32[1,8,128], index: 1, kind: input, shape index: {}]
  %s2 = inlined_call_operand.hbm [shape: f32[128,128], index: 2, kind: input, shape index: {}]
  %s3 = inlined_call_operand.hbm [shape: f32[1,8,128], index: 3, kind: output, shape index: {}]
  %s4 = sld [smem:[#allocation0]]
  $region38: #{tpu_custom_call.1} parent=0
    _
  %s6 = ssub.s32 1, %s4
  %s7 = scalar_select 0, %s6, %s4
  $region1: #{tpu_custom_call.1} parent=0
    #allocation3 [shape = 'u8[4096]{0}', space=vmem, size = 0x1000, scoped, tag = 'input window, operand 0, single buffered']
    #allocation4 [shape = 's32[1]{0}', space=sflag, size = 0x4, scoped, tag = 'scoped memory for tpu_custom_call.1']
    #allocation5 [shape = 's32[1]{0}', space=sflag, size = 0x4, scoped, tag = 'scoped memory for tpu_custom_call.1']
    #allocation6 [shape = 'u8[4096]{0}', space=vmem, size = 0x1000, scoped, tag = 'input window, operand 1, single buffered']
    #allocation7 [shape = 's32[1]{0}', space=sflag, size = 0x4, scoped, tag = 'scoped memory for tpu_custom_call.1']
    #allocation8 [shape = 'u8[65536]{0}', space=vmem, size = 0x10000, scoped, tag = 'input window, operand 2, single buffered']
    #allocation9 [shape = 'u8[4096]{0}', space=vmem, size = 0x1000, scoped, tag = 'output window, operand 0, single buffered']
    %8 = vsyncpa [#allocation4], 0
    %9 = vsyncpa [#allocation7], 0
    %10 = vsyncpa [#allocation5], 0
    // Predicated region
    $region2: #{tpu_custom_call.1} parent=1 // pred_check
      _
    $region3: #{tpu_custom_call.1} parent=1 // pred_check_branch
      %12 = sbr.rel (0) target = $region5
    $region4: #{tpu_custom_call.1} parent=1 // pred_region
      %s14 = ssub.s32 128, 128
      %15 = vsyncadd [#allocation4], %s14
      %s17 = sshll.u32 [#allocation3], 4
      %s18 = int_to_ptr.vmem [resolvable:$true] %s17
      %20 = dma.hbm_to_vmem [thread:$0]  %s0, 128, %s18, [#allocation4]
    $region5: #{tpu_custom_call.1} parent=1 // pred_fallthru
      _
    // Predicated region
    $region6: #{tpu_custom_call.1} parent=1 // pred_check
      _
    $region7: #{tpu_custom_call.1} parent=1 // pred_check_branch
      %22 = sbr.rel (0) target = $region9
    $region8: #{tpu_custom_call.1} parent=1 // pred_region
      %s24 = ssub.s32 128, 128
      %25 = vsyncadd [#allocation7], %s24
      %s27 = sshll.u32 [#allocation6], 4
      %s28 = int_to_ptr.vmem [resolvable:$true] %s27
      %30 = dma.hbm_to_vmem [thread:$0]  %s1, 128, %s28, [#allocation7]
    $region9: #{tpu_custom_call.1} parent=1 // pred_fallthru
      _
    // Predicated region
    $region10: #{tpu_custom_call.1} parent=1 // pred_check
      _
    $region11: #{tpu_custom_call.1} parent=1 // pred_check_branch
      %32 = sbr.rel (0) target = $region13
    $region12: #{tpu_custom_call.1} parent=1 // pred_region
      %s34 = ssub.s32 2048, 2048
      %35 = vsyncadd [#allocation7], %s34
      %s36 = sshll.u32 [#allocation8], 4
      %s37 = int_to_ptr.vmem [resolvable:$true] %s36
      %42 = dma.hbm_to_vmem [thread:$0]  %s2, 2048, %s37, [#allocation7], 128, 128, 8
    $region13: #{tpu_custom_call.1} parent=1 // pred_fallthru
      _
    // Predicated region
    $region14: #{tpu_custom_call.1} parent=1 // pred_check
      _
    $region15: #{tpu_custom_call.1} parent=1 // pred_check_branch
      %44 = sbr.rel (0) target = $region17
    $region16: #{tpu_custom_call.1} parent=1 // pred_region
      %45 = dma.done [#allocation4], 128
    $region17: #{tpu_custom_call.1} parent=1 // pred_fallthru
      _
    // Predicated region
    $region18: #{tpu_custom_call.1} parent=1 // pred_check
      _
    $region19: #{tpu_custom_call.1} parent=1 // pred_check_branch
      %47 = sbr.rel (0) target = $region21
    $region20: #{tpu_custom_call.1} parent=1 // pred_region
      %48 = dma.done [#allocation7], 128
    $region21: #{tpu_custom_call.1} parent=1 // pred_fallthru
      _
    // Predicated region
    $region22: #{tpu_custom_call.1} parent=1 // pred_check
      _
    $region23: #{tpu_custom_call.1} parent=1 // pred_check_branch
      %50 = sbr.rel (0) target = $region25
    $region24: #{tpu_custom_call.1} parent=1 // pred_region
      %51 = dma.done [#allocation7], 2048
    $region25: #{tpu_custom_call.1} parent=1 // pred_fallthru
      _
    %p52 = scmp.eq.s32.totalorder 0, 0
    // Predicated region
    $region26: #{tpu_custom_call.1} parent=1 // pred_check
      %p53 = pneg %p52
    $region27: #{tpu_custom_call.1} parent=1 // pred_check_branch
      %55 = sbr.rel (%p53) target = $region29
    $region28: #{tpu_custom_call.1} parent=1 // pred_region
      %v56 = vld [vmem:[#allocation3] sm:$0xff]
      %57 = vst [vmem:[#allocation2] sm:$0xff] %v56
    $region29: #{tpu_custom_call.1} parent=1 // pred_fallthru
      _
    %v58 = vld [vmem:[#allocation2] sm:$0xff]
    %v59 = vld [vmem:[#allocation6] sm:$0xff]
    %v60 = vld [vmem:[#allocation8] sm:$0xff]
    %v61 = vld [vmem:[#allocation8 + $0x8] sm:$0xff]
    %v62 = vld [vmem:[#allocation8 + $0x10] sm:$0xff]
    %v63 = vld [vmem:[#allocation8 + $0x18] sm:$0xff]
    %v64 = vld [vmem:[#allocation8 + $0x20] sm:$0xff]
    %v65 = vld [vmem:[#allocation8 + $0x28] sm:$0xff]
    %v66 = vld [vmem:[#allocation8 + $0x30] sm:$0xff]
    %v67 = vld [vmem:[#allocation8 + $0x38] sm:$0xff]
    %v68 = vld [vmem:[#allocation8 + $0x40] sm:$0xff]
    %v69 = vld [vmem:[#allocation8 + $0x48] sm:$0xff]
    %v70 = vld [vmem:[#allocation8 + $0x50] sm:$0xff]
    %v71 = vld [vmem:[#allocation8 + $0x58] sm:$0xff]
    %v72 = vld [vmem:[#allocation8 + $0x60] sm:$0xff]
    %v73 = vld [vmem:[#allocation8 + $0x68] sm:$0xff]
    %v74 = vld [vmem:[#allocation8 + $0x70] sm:$0xff]
    %v75 = vld [vmem:[#allocation8 + $0x78] sm:$0xff]
    %76 = vmatprep.subr.mxu0 0.0
    %77 = vmatpush1.msra.mxu0 %v75
    %78 = vmatprep.subr.mxu0 0.0
    %79 = vmatpush1.msra.mxu0 %v74
    %80 = vmatprep.subr.mxu0 0.0
    %81 = vmatpush1.msra.mxu0 %v73
    %82 = vmatprep.subr.mxu0 0.0
    %83 = vmatpush1.msra.mxu0 %v72
    %84 = vmatprep.subr.mxu0 0.0
    %85 = vmatpush1.msra.mxu0 %v71
    %86 = vmatprep.subr.mxu0 0.0
    %87 = vmatpush1.msra.mxu0 %v70
    %88 = vmatprep.subr.mxu0 0.0
    %89 = vmatpush1.msra.mxu0 %v69
    %90 = vmatprep.subr.mxu0 0.0
    %91 = vmatpush1.msra.mxu0 %v68
    %92 = vmatprep.subr.mxu0 0.0
    %93 = vmatpush1.msra.mxu0 %v67
    %94 = vmatprep.subr.mxu0 0.0
    %95 = vmatpush1.msra.mxu0 %v66
    %96 = vmatprep.subr.mxu0 0.0
    %97 = vmatpush1.msra.mxu0 %v65
    %98 = vmatprep.subr.mxu0 0.0
    %99 = vmatpush1.msra.mxu0 %v64
    %100 = vmatprep.subr.mxu0 0.0
    %101 = vmatpush1.msra.mxu0 %v63
    %102 = vmatprep.subr.mxu0 0.0
    %103 = vmatpush1.msra.mxu0 %v62
    %104 = vmatprep.subr.mxu0 0.0
    %105 = vmatpush1.msra.mxu0 %v61
    %106 = vmatprep.subr.mxu0 0.0
    %107 = vmatpush1.msra.mxu0 %v60
    %108 = vmatprep.subr.mxu0 0.0
    %109 = vmatpush2.msra.mxu0 0.0
    %110 = vmatprep.subr.mxu0 0.0
    %111 = vmatpush2.msra.mxu0 0.0
    %112 = vmatprep.subr.mxu0 0.0
    %113 = vmatpush2.msra.mxu0 0.0
    %114 = vmatprep.subr.mxu0 0.0
    %115 = vmatpush2.msra.mxu0 0.0
    %116 = vmatprep.subr.mxu0 0.0
    %117 = vmatpush2.msra.mxu0 0.0
    %118 = vmatprep.subr.mxu0 0.0
    %119 = vmatpush2.msra.mxu0 0.0
    %120 = vmatprep.subr.mxu0 0.0
    %121 = vmatpush2.msra.mxu0 0.0
    %122 = vmatprep.subr.mxu0 0.0
    %123 = vmatpush2.msra.mxu0 0.0
    %124 = vmatprep.subr.mxu0 0.0
    %125 = vmatpush2.msra.mxu0 0.0
    %126 = vmatprep.subr.mxu0 0.0
    %127 = vmatpush2.msra.mxu0 0.0
    %128 = vmatprep.subr.mxu0 0.0
    %129 = vmatpush2.msra.mxu0 0.0
    %130 = vmatprep.subr.mxu0 0.0
    %131 = vmatpush2.msra.mxu0 0.0
    %132 = vmatprep.subr.mxu0 0.0
    %133 = vmatpush2.msra.mxu0 0.0
    %134 = vmatprep.subr.mxu0 0.0
    %135 = vmatpush2.msra.mxu0 0.0
    %136 = vmatprep.subr.mxu0 0.0
    %137 = vmatpush2.msra.mxu0 0.0
    %138 = vmatprep.subr.mxu0 0.0
    %139 = vmatpush2.msra.mxu0 0.0
    %140 = vmatprep.mubr.f32.mxu0 0.0
    %141 = vmatmul.mubr.f32.gmra.mxu0 %v58
    %v142 = vpop.f32.mrf.mxu0
    %v143 = vadd.f32 %v59, %v142
    %v144 = vpop.f32.mrf.mxu0
    %145 = vdwg.mxu0
    %v146 = vmax.f32 %v143, 0.0
    %147 = vst [vmem:[#allocation9] sm:$0xff] %v146
    %148 = vst [vmem:[#allocation2] sm:$0xff] %v146
    // Predicated region
    $region30: #{tpu_custom_call.1} parent=1 // pred_check
      _
    $region31: #{tpu_custom_call.1} parent=1 // pred_check_branch
      %150 = sbr.rel (0) target = $region33
    $region32: #{tpu_custom_call.1} parent=1 // pred_region
      %s152 = ssub.s32 128, 128
      %153 = vsyncadd [#allocation5], %s152
      %s155 = sshll.u32 [#allocation9], 4
      %s156 = int_to_ptr.vmem [resolvable:$true] %s155
      %158 = dma.vmem_to_hbm [thread:$0]  %s156, 128, %s3, [#allocation5]
    $region33: #{tpu_custom_call.1} parent=1 // pred_fallthru
      _
    // Predicated region
    $region34: #{tpu_custom_call.1} parent=1 // pred_check
      _
    $region35: #{tpu_custom_call.1} parent=1 // pred_check_branch
      %160 = sbr.rel (0) target = $region37
    $region36: #{tpu_custom_call.1} parent=1 // pred_region
      %161 = dma.done [#allocation5], 128
    $region37: #{tpu_custom_call.1} parent=1 // pred_fallthru
      _
    %162 = vsyncpa [#allocation4], 1
    %163 = vsyncpa [#allocation7], 1
    %164 = vsyncpa [#allocation5], 1

</llo_original>
